<compile_context>
chip_gen: v7x
topology: tpu7x:2x2x1
jax: 0.10.0
libtpu: 0.0.40
codegen_flags: <defaults>
</compile_context>

<pallas_src>
import functools

import jax
import jax.numpy as jnp
from jax.experimental import pallas as pl
from jax.experimental.pallas import tpu as pltpu


# ---------------------------------------------------------------------------
# Chip-aware sizing helpers
# ---------------------------------------------------------------------------
def _physical_vmem_bytes():
    """Physical VMEM per TensorCore (128 MiB v5e/v6e, 64 MiB v7x)."""
    try:
        cap = int(pltpu.get_tpu_info().vmem_capacity_bytes)
        if cap > 0:
            return cap
    except Exception:
        pass
    return 64 * 1024 * 1024          # conservative fallback (v7x-sized)


def _vmem_limit(nbytes, phys):
    """Scoped-VMEM request: footprint + headroom, clamped chip-aware
    (7/8 physical: 56 MiB on v7x, 112 MiB on v5e/v6e)."""
    cap = (phys * 7) // 8
    return int(min(max(nbytes + (8 << 20), 32 << 20), cap))


def _pick_hw_tile(HW, C, budget_bytes):
    """HW-tile width for the tiled path.  The worst pass streams r, d in and
    o out (3 slabs x 2 buffers) plus ~2 transient slabs -> ~8 f32 slabs per
    column.  Floor at 512 lanes (per-step overhead), never wider than the
    128-rounded row."""
    per_col = 8 * C * 4
    t = (budget_bytes // per_col // 128) * 128
    t = max(t, 512)
    t = min(t, pl.cdiv(HW, 128) * 128)
    return max(t, 128)


# ---------------------------------------------------------------------------
# Channel-attention + down2 MLP on the max-pooled channel vector.
# All matvecs are VPU multiplies + XLU reductions (no MXU): the operands are
# tiny and an N=1 MXU matvec pads to a full systolic tile.
# ---------------------------------------------------------------------------
def _mlp_s(m_d, m_r, fc1d_t, fc1r_t, eye_r, fc2_t, dw, db, a):
    # m_d, m_r : (C, 1) global-max columns
    # fc1d_t/fc1r_t : (C, c2r) = fc1_w[:, :C].T / fc1_w[:, C:].T
    # fc2_t : (c2r, 2C) = fc2_w.T ; dw : (C, 2C) BN-folded ; db : (C, 1)
    h1 = (jnp.sum(fc1d_t * m_d, axis=0, keepdims=True)
          + jnp.sum(fc1r_t * m_r, axis=0, keepdims=True))       # (1, c2r)
    h1 = jnp.maximum(h1, 0.0)                                   # ReLU
    # flip (1, c2r) row -> (c2r, 1) column via identity multiply (no transpose)
    h1c = jnp.sum(eye_r * h1, axis=1, keepdims=True)            # (c2r, 1)
    h2 = jax.nn.sigmoid(jnp.sum(fc2_t * h1c, axis=0, keepdims=True))  # (1, 2C)
    y = jnp.sum(dw * h2, axis=-1, keepdims=True) + db           # (C, 1)
    return jnp.where(y > 0.0, y, a * y)                         # PReLU


# ---------------------------------------------------------------------------
# Path 1: whole (C, HW) slab per batch resides in VMEM -> single pass.
# ---------------------------------------------------------------------------
def _if_single_pass_kernel(r_ref, d_ref, fc1d_t_ref, fc1r_t_ref, eye_ref,
                           fc2_t_ref, dw_ref, db_ref, a_ref, o_ref):
    r = r_ref[0]                                    # (C, HW)
    d = d_ref[0]                                    # (C, HW)
    inv_hw = 1.0 / r.shape[-1]

    m_d = jnp.max(d, axis=-1, keepdims=True)        # (C, 1)
    m_r = jnp.max(r, axis=-1, keepdims=True)        # (C, 1)
    s = _mlp_s(m_d, m_r, fc1d_t_ref[...], fc1r_t_ref[...], eye_ref[...],
               fc2_t_ref[...], dw_ref[...], db_ref[...], a_ref[...])

    # Keep only rd_ca live across the reductions; recompute s*d in the store.
    rd_ca = s * d + r
    x_h = jnp.max(rd_ca, axis=-1, keepdims=True)    # AdaptiveMaxPool2d((1,1))
    x_s = jnp.sum(rd_ca, axis=-1, keepdims=True)    # mean = x_s * inv_hw
    k = x_h + x_s * inv_hw + 2.0
    # D = D0 + D1 = 4*r + (s*d) * (x_h + x_w + 2)
    o_ref[0] = 4.0 * r + (s * d) * k


# ---------------------------------------------------------------------------
# Path 2 (HW tiled, big C*HW):
#   pass 1 -> per-(batch, core-split) partial max/sum of d, r
#   XLA glue -> channel attention + down2 + PReLU -> s, and x_w
#   pass 2 -> partial max of rd_ca = s*d + r -> x_h
#   XLA glue -> k = x_h + x_w + 2
#   pass 3 -> elementwise output (fully parallel)
# ---------------------------------------------------------------------------
def _stats_kernel(r_ref, d_ref, pmd_ref, pmr_ref, psd_ref, psr_ref,
                  md_sc, mr_sc, sd_sc, sr_sc, *, hw, tile, needs_mask):
    t = pl.program_id(2)
    nt = pl.num_programs(2)

    @pl.when(t == 0)
    def _():
        md_sc[...] = jnp.full(md_sc.shape, -jnp.inf, jnp.float32)
        mr_sc[...] = jnp.full(mr_sc.shape, -jnp.inf, jnp.float32)
        sd_sc[...] = jnp.zeros(sd_sc.shape, jnp.float32)
        sr_sc[...] = jnp.zeros(sr_sc.shape, jnp.float32)

    r = r_ref[0]                                    # (C, tile)
    d = d_ref[0]                                    # (C, tile)
    if needs_mask:
        col0 = (pl.program_id(1) * nt + t) * tile
        col = col0 + jax.lax.broadcasted_iota(jnp.int32, r.shape, 1)
        valid = col < hw
        d_max = jnp.where(valid, d, -jnp.inf)
        r_max = jnp.where(valid, r, -jnp.inf)
        d_sum = jnp.where(valid, d, 0.0)
        r_sum = jnp.where(valid, r, 0.0)
    else:
        d_max = d_sum = d
        r_max = r_sum = r

    md_sc[...] = jnp.maximum(md_sc[...], jnp.max(d_max, axis=-1, keepdims=True))
    mr_sc[...] = jnp.maximum(mr_sc[...], jnp.max(r_max, axis=-1, keepdims=True))
    sd_sc[...] = sd_sc[...] + jnp.sum(d_sum, axis=-1, keepdims=True)
    sr_sc[...] = sr_sc[...] + jnp.sum(r_sum, axis=-1, keepdims=True)

    @pl.when(t == nt - 1)
    def _():
        pmd_ref[0, 0] = md_sc[...]
        pmr_ref[0, 0] = mr_sc[...]
        psd_ref[0, 0] = sd_sc[...]
        psr_ref[0, 0] = sr_sc[...]


def _xh_kernel(s_ref, r_ref, d_ref, pmx_ref, mx_sc, *, hw, tile, needs_mask):
    t = pl.program_id(2)
    nt = pl.num_programs(2)

    @pl.when(t == 0)
    def _():
        mx_sc[...] = jnp.full(mx_sc.shape, -jnp.inf, jnp.float32)

    rd_ca = s_ref[0] * d_ref[0] + r_ref[0]          # (C, tile)
    if needs_mask:
        col0 = (pl.program_id(1) * nt + t) * tile
        col = col0 + jax.lax.broadcasted_iota(jnp.int32, rd_ca.shape, 1)
        rd_ca = jnp.where(col < hw, rd_ca, -jnp.inf)
    mx_sc[...] = jnp.maximum(mx_sc[...], jnp.max(rd_ca, axis=-1, keepdims=True))

    @pl.when(t == nt - 1)
    def _():
        pmx_ref[0, 0] = mx_sc[...]


def _out_kernel(s_ref, k_ref, r_ref, d_ref, o_ref):
    r = r_ref[0]
    d = d_ref[0]
    o_ref[0] = 4.0 * r + (s_ref[0] * d) * k_ref[0]


# ---------------------------------------------------------------------------
# Parameters / wrapper
# ---------------------------------------------------------------------------
def init_params(key, dim):
    c2 = 2 * dim
    c2r = c2 // 16
    ks = jax.random.split(key, 4)
    return dict(
        fc1_w=jax.random.normal(ks[0], (c2r, c2), jnp.float32) * 0.1,
        fc2_w=jax.random.normal(ks[1], (c2, c2r), jnp.float32) * 0.1,
        dw=jax.random.normal(ks[2], (dim, c2), jnp.float32) * 0.1,
        db=jax.random.normal(ks[3], (dim,), jnp.float32) * 0.1,
        bn_gamma=jnp.ones((dim,), jnp.float32),
        bn_beta=jnp.zeros((dim,), jnp.float32),
        bn_mean=jnp.zeros((dim,), jnp.float32),
        bn_var=jnp.ones((dim,), jnp.float32),
        prelu_a=jnp.float32(0.25),
        eps=1e-5,
    )


def _fold_params(params, C):
    # Fold eval-mode BatchNorm and the down2 bias into the 1x1 conv weights.
    bn_scale = params["bn_gamma"] / jnp.sqrt(params["bn_var"] + params["eps"])
    bn_shift = params["bn_beta"] - params["bn_mean"] * bn_scale
    dw = params["dw"] * bn_scale[:, None]                       # (C, 2C)
    db = (params["db"] * bn_scale + bn_shift).reshape(C, 1)     # (C, 1)
    fc1d_t = params["fc1_w"][:, :C].T                           # (C, c2r)
    fc1r_t = params["fc1_w"][:, C:].T                           # (C, c2r)
    fc2_t = params["fc2_w"].T                                   # (c2r, 2C)
    c2r = (2 * C) // 16
    eye_r = jnp.eye(c2r, dtype=jnp.float32)                     # (c2r, c2r)
    a = jnp.reshape(params["prelu_a"], (1, 1)).astype(jnp.float32)
    return fc1d_t, fc1r_t, eye_r, fc2_t, dw, db, a


def if_forward(r, d, params, *, vmem_budget_bytes=None, hw_tile=None):
    B, C, H, W = r.shape                 # NCHW, PyTorch convention
    HW = H * W
    c2 = 2 * C
    c2r = c2 // 16

    fc1d_t, fc1r_t, eye_r, fc2_t, dw, db, a = _fold_params(params, C)

    r3 = r.reshape(B, C, HW)
    d3 = d.reshape(B, C, HW)

    phys = _physical_vmem_bytes()
    weight_bytes = 4 * (fc1d_t.size + fc1r_t.size + eye_r.size + fc2_t.size
                        + dw.size + db.size + a.size)
    if vmem_budget_bytes is None:
        # Generation-aware budget: ~0.75x physical VMEM minus (double-buffered)
        # weights -> ~96 MiB on v5e/v6e, ~48 MiB on v7x.
        vmem_budget_bytes = max((phys * 3) // 4 - 2 * weight_bytes, 8 << 20)

    # Single-pass footprint: r, d, o double-buffered (6 slabs) + the rd_ca
    # temporary and the recomputed s*d store operand (~2 slabs) + weights.
    single_pass_bytes = 8 * C * HW * 4 + 2 * weight_bytes

    if single_pass_bytes <= vmem_budget_bytes:
        out = pl.pallas_call(
            _if_single_pass_kernel,
            out_shape=jax.ShapeDtypeStruct((B, C, HW), jnp.float32),
            grid_spec=pltpu.PrefetchScalarGridSpec(
                num_scalar_prefetch=0,
                grid=(B,),
                in_specs=[
                    pl.BlockSpec((1, C, HW), lambda b: (b, 0, 0)),
                    pl.BlockSpec((1, C, HW), lambda b: (b, 0, 0)),
                    pl.BlockSpec((C, c2r), lambda b: (0, 0)),
                    pl.BlockSpec((C, c2r), lambda b: (0, 0)),
                    pl.BlockSpec((c2r, c2r), lambda b: (0, 0)),
                    pl.BlockSpec((c2r, c2), lambda b: (0, 0)),
                    pl.BlockSpec((C, c2), lambda b: (0, 0)),
                    pl.BlockSpec((C, 1), lambda b: (0, 0)),
                    pl.BlockSpec((1, 1), lambda b: (0, 0)),
                ],
                out_specs=pl.BlockSpec((1, C, HW), lambda b: (b, 0, 0)),
            ),
            compiler_params=pltpu.CompilerParams(
                dimension_semantics=("parallel",),
                vmem_limit_bytes=_vmem_limit(single_pass_bytes, phys)),
        )(r3, d3, fc1d_t, fc1r_t, eye_r, fc2_t, dw, db, a)
        return out.reshape(B, C, H, W)

    # ---------------- HW-tiled path (large C*HW / 64-MiB-VMEM v7x) ----------
    if hw_tile is None:
        hw_tile = _pick_hw_tile(HW, C, vmem_budget_bytes)
    n_blocks = pl.cdiv(HW, hw_tile)
    n_split = 2 if n_blocks >= 2 else 1       # feed both v7x TensorCores
    nt_per = pl.cdiv(n_blocks, n_split)
    needs_mask = (n_split * nt_per * hw_tile != HW)
    vlim = _vmem_limit(8 * C * hw_tile * 4, phys)

    def tile_map(b, s, t):
        # Clamp: redundant trailing tiles of the last split re-read the final
        # block; they are fully masked out in-kernel via the unclamped offset.
        idx = s * nt_per + t
        return (b, 0, jnp.minimum(idx, n_blocks - 1))

    rd_tile_spec = pl.BlockSpec((1, C, hw_tile), tile_map)
    stat_spec = pl.BlockSpec((1, 1, C, 1), lambda b, s, t: (b, s, 0, 0))
    s_col_spec = pl.BlockSpec((1, C, 1), lambda b, s, t: (b, 0, 0))
    red_params = pltpu.CompilerParams(
        dimension_semantics=("parallel", "parallel", "arbitrary"),
        vmem_limit_bytes=vlim)

    # pass 1: per-(batch, split) partial max/sum of d and r
    pmax_d, pmax_r, psum_d, psum_r = pl.pallas_call(
        functools.partial(_stats_kernel, hw=HW, tile=hw_tile,
                          needs_mask=needs_mask),
        out_shape=tuple(jax.ShapeDtypeStruct((B, n_split, C, 1), jnp.float32)
                        for _ in range(4)),
        grid_spec=pltpu.PrefetchScalarGridSpec(
            num_scalar_prefetch=0,
            grid=(B, n_split, nt_per),
            in_specs=[rd_tile_spec, rd_tile_spec],
            out_specs=(stat_spec,) * 4,
            scratch_shapes=[pltpu.VMEM((C, 1), jnp.float32) for _ in range(4)],
        ),
        compiler_params=red_params,
    )(r3, d3)

    # Tiny XLA glue: channel attention MLP + BN-folded down2 + PReLU -> s,
    # and the mean pool via the decomposition mean(s*d + r) = s*mean(d)+mean(r).
    max_d = jnp.max(pmax_d, axis=1).reshape(B, C)
    max_r = jnp.max(pmax_r, axis=1).reshape(B, C)
    sum_d = jnp.sum(psum_d, axis=1).reshape(B, C)
    sum_r = jnp.sum(psum_r, axis=1).reshape(B, C)
    h1 = jnp.maximum(max_d @ fc1d_t + max_r @ fc1r_t, 0.0)      # (B, c2r)
    h2 = jax.nn.sigmoid(h1 @ fc2_t)                             # (B, 2C)
    y = h2 @ dw.T + db.reshape(1, C)                            # (B, C)
    s = jnp.where(y > 0.0, y, a * y)                            # PReLU
    x_w = (s * sum_d + sum_r) * (1.0 / HW)                      # (B, C)
    s3 = s.reshape(B, C, 1)

    # pass 2: partial max of rd_ca = s*d + r  ->  x_h
    pmax_ca = pl.pallas_call(
        functools.partial(_xh_kernel, hw=HW, tile=hw_tile,
                          needs_mask=needs_mask),
        out_shape=jax.ShapeDtypeStruct((B, n_split, C, 1), jnp.float32),
        grid_spec=pltpu.PrefetchScalarGridSpec(
            num_scalar_prefetch=0,
            grid=(B, n_split, nt_per),
            in_specs=[s_col_spec, rd_tile_spec, rd_tile_spec],
            out_specs=stat_spec,
            scratch_shapes=[pltpu.VMEM((C, 1), jnp.float32)],
        ),
        compiler_params=red_params,
    )(s3, r3, d3)

    x_h = jnp.max(pmax_ca, axis=1)                              # (B, C, 1)
    k = x_h + x_w.reshape(B, C, 1) + 2.0                        # (B, C, 1)

    # pass 3: elementwise epilogue, fully parallel grid (both TCs, all tiles)
    out_tile_spec = pl.BlockSpec((1, C, hw_tile), lambda b, t: (b, 0, t))
    col2_spec = pl.BlockSpec((1, C, 1), lambda b, t: (b, 0, 0))
    out = pl.pallas_call(
        _out_kernel,
        out_shape=jax.ShapeDtypeStruct((B, C, HW), jnp.float32),
        grid_spec=pltpu.PrefetchScalarGridSpec(
            num_scalar_prefetch=0,
            grid=(B, n_blocks),
            in_specs=[col2_spec, col2_spec, out_tile_spec, out_tile_spec],
            out_specs=out_tile_spec,
        ),
        compiler_params=pltpu.CompilerParams(
            dimension_semantics=("parallel", "parallel"),
            vmem_limit_bytes=vlim),
    )(s3, k, r3, d3)
    return out.reshape(B, C, H, W)


def ref_forward(r, d, params):
    """Pure-JAX reference mirroring the PyTorch forward, for verification."""
    bn_scale = params["bn_gamma"] / jnp.sqrt(params["bn_var"] + params["eps"])
    bn_shift = params["bn_beta"] - params["bn_mean"] * bn_scale
    rd = jnp.concatenate([d, r], axis=1)                   # (B, 2C, H, W)
    m = jnp.max(rd, axis=(2, 3))                           # AdaptiveMaxPool2d(1)
    h1 = jnp.maximum(m @ params["fc1_w"].T, 0.0)
    h2 = jax.nn.sigmoid(h1 @ params["fc2_w"].T)
    y = h2 @ params["dw"].T + params["db"]
    y = y * bn_scale + bn_shift
    s = jnp.where(y > 0, y, params["prelu_a"] * y)         # PReLU
    s = s[:, :, None, None]
    rd_ca0 = s * d
    rd_ca = rd_ca0 + r
    x_h = jnp.max(rd_ca, axis=(2, 3), keepdims=True)
    x_w = jnp.mean(rd_ca, axis=(2, 3), keepdims=True)
    D0 = r + (rd_ca0 * x_h + rd_ca)
    D1 = r + (rd_ca0 * x_w + rd_ca)
    return D0 + D1


if __name__ == "__main__":
    key = jax.random.PRNGKey(0)
    dim, B, H, W = 32, 2, 16, 16
    k0, k1, k2 = jax.random.split(key, 3)
    r = jax.random.normal(k0, (B, dim, H, W), jnp.float32)
    d = jax.random.normal(k1, (B, dim, H, W), jnp.float32)
    params = init_params(k2, dim)

    ref = ref_forward(r, d, params)

    # 1) Default chip-aware budget -> single-pass kernel (slab fits VMEM).
    out1 = jax.block_until_ready(if_forward(r, d, params))
    assert out1.shape == (B, dim, H, W)
    assert jnp.allclose(out1, ref, atol=1e-4, rtol=1e-4), \
        float(jnp.max(jnp.abs(out1 - ref)))

    # 2) Force the HW-tiled (large-resolution / v7x) path with a tiny budget.
    out2 = jax.block_until_ready(
        if_forward(r, d, params, vmem_budget_bytes=128 * 1024))
    assert jnp.allclose(out2, ref, atol=1e-4, rtol=1e-4), \
        float(jnp.max(jnp.abs(out2 - ref)))

    # 3) Non-128-divisible spatial size (17x17) through the tiled path with a
    #    small forced tile: exercises the remainder masking, partial edge
    #    blocks and the core-split reduction grid.
    H2 = W2 = 17
    r2 = jax.random.normal(jax.random.PRNGKey(3), (B, dim, H2, W2), jnp.float32)
    d2 = jax.random.normal(jax.random.PRNGKey(4), (B, dim, H2, W2), jnp.float32)
    ref2 = ref_forward(r2, d2, params)
    out3 = jax.block_until_ready(
        if_forward(r2, d2, params, vmem_budget_bytes=128 * 1024, hw_tile=128))
    assert jnp.allclose(out3, ref2, atol=1e-4, rtol=1e-4), \
        float(jnp.max(jnp.abs(out3 - ref2)))

    print("KERNEL_OK")
</pallas_src>

<mosaic_0001>
module attributes {stable_mosaic.version = 11 : i64} {
  func.func @_if_single_pass_kernel(%arg0: i32, %arg1: memref<1x32x256xf32, #tpu.memory_space<vmem>>, %arg2: memref<1x32x256xf32, #tpu.memory_space<vmem>>, %arg3: memref<32x4xf32, #tpu.memory_space<vmem>>, %arg4: memref<32x4xf32, #tpu.memory_space<vmem>>, %arg5: memref<4x4xf32, #tpu.memory_space<vmem>>, %arg6: memref<4x64xf32, #tpu.memory_space<vmem>>, %arg7: memref<32x64xf32, #tpu.memory_space<vmem>>, %arg8: memref<32x1xf32, #tpu.memory_space<vmem>>, %arg9: memref<1x1xf32, #tpu.memory_space<vmem>>, %arg10: memref<1x32x256xf32, #tpu.memory_space<vmem>>) attributes {dimension_semantics = [#tpu.dimension_semantics<parallel>], iteration_bounds = array<i64: 2>, scalar_prefetch = 0 : i64, scratch_operands = 0 : i64, tpu.core_type = #tpu.core_type<tc>, window_params = [{transform_indices = @transform_0, window_bounds = array<i64: 1, 32, 256>}, {transform_indices = @transform_1, window_bounds = array<i64: 1, 32, 256>}, {pipeline_mode = #tpu.pipeline_mode<synchronous>, transform_indices = @transform_2, window_bounds = array<i64: 32, 4>}, {pipeline_mode = #tpu.pipeline_mode<synchronous>, transform_indices = @transform_3, window_bounds = array<i64: 32, 4>}, {pipeline_mode = #tpu.pipeline_mode<synchronous>, transform_indices = @transform_4, window_bounds = array<i64: 4, 4>}, {pipeline_mode = #tpu.pipeline_mode<synchronous>, transform_indices = @transform_5, window_bounds = array<i64: 4, 64>}, {pipeline_mode = #tpu.pipeline_mode<synchronous>, transform_indices = @transform_6, window_bounds = array<i64: 32, 64>}, {pipeline_mode = #tpu.pipeline_mode<synchronous>, transform_indices = @transform_7, window_bounds = array<i64: 32, 1>}, {pipeline_mode = #tpu.pipeline_mode<synchronous>, transform_indices = @transform_8, window_bounds = array<i64: 1, 1>}, {transform_indices = @transform_9, window_bounds = array<i64: 1, 32, 256>}]} {
    %c0 = arith.constant 0 : index
    %c0_0 = arith.constant 0 : index
    %c0_1 = arith.constant 0 : index
    %0 = vector.load %arg1[%c0, %c0_0, %c0_1] : memref<1x32x256xf32, #tpu.memory_space<vmem>>, vector<1x32x256xf32>
    %1 = vector.shape_cast %0 : vector<1x32x256xf32> to vector<32x256xf32>
    %c0_2 = arith.constant 0 : index
    %c0_3 = arith.constant 0 : index
    %c0_4 = arith.constant 0 : index
    %2 = vector.load %arg2[%c0_2, %c0_3, %c0_4] : memref<1x32x256xf32, #tpu.memory_space<vmem>>, vector<1x32x256xf32>
    %3 = vector.shape_cast %2 : vector<1x32x256xf32> to vector<32x256xf32>
    %cst = arith.constant dense<0xFF800000> : vector<32xf32>
    %4 = vector.multi_reduction <maximumf>, %3, %cst [1] : vector<32x256xf32> to vector<32xf32>
    %5 = vector.shape_cast %4 : vector<32xf32> to vector<32x1xf32>
    %cst_5 = arith.constant dense<0xFF800000> : vector<32xf32>
    %6 = vector.multi_reduction <maximumf>, %1, %cst_5 [1] : vector<32x256xf32> to vector<32xf32>
    %7 = vector.shape_cast %6 : vector<32xf32> to vector<32x1xf32>
    %c0_6 = arith.constant 0 : index
    %c0_7 = arith.constant 0 : index
    %8 = vector.load %arg3[%c0_6, %c0_7] : memref<32x4xf32, #tpu.memory_space<vmem>>, vector<32x4xf32>
    %c0_8 = arith.constant 0 : index
    %c0_9 = arith.constant 0 : index
    %9 = vector.load %arg4[%c0_8, %c0_9] : memref<32x4xf32, #tpu.memory_space<vmem>>, vector<32x4xf32>
    %c0_10 = arith.constant 0 : index
    %c0_11 = arith.constant 0 : index
    %10 = vector.load %arg5[%c0_10, %c0_11] : memref<4x4xf32, #tpu.memory_space<vmem>>, vector<4x4xf32>
    %c0_12 = arith.constant 0 : index
    %c0_13 = arith.constant 0 : index
    %11 = vector.load %arg6[%c0_12, %c0_13] : memref<4x64xf32, #tpu.memory_space<vmem>>, vector<4x64xf32>
    %c0_14 = arith.constant 0 : index
    %c0_15 = arith.constant 0 : index
    %12 = vector.load %arg7[%c0_14, %c0_15] : memref<32x64xf32, #tpu.memory_space<vmem>>, vector<32x64xf32>
    %c0_16 = arith.constant 0 : index
    %c0_17 = arith.constant 0 : index
    %13 = vector.load %arg8[%c0_16, %c0_17] : memref<32x1xf32, #tpu.memory_space<vmem>>, vector<32x1xf32>
    %c0_18 = arith.constant 0 : index
    %c0_19 = arith.constant 0 : index
    %14 = vector.load %arg9[%c0_18, %c0_19] : memref<1x1xf32, #tpu.memory_space<vmem>>, vector<1x1xf32>
    %15 = vector.broadcast %5 : vector<32x1xf32> to vector<32x4xf32>
    %16 = arith.mulf %8, %15 : vector<32x4xf32>
    %cst_20 = arith.constant dense<0.000000e+00> : vector<4xf32>
    %17 = vector.multi_reduction <add>, %16, %cst_20 [0] : vector<32x4xf32> to vector<4xf32>
    %18 = vector.shape_cast %17 : vector<4xf32> to vector<1x4xf32>
    %19 = vector.broadcast %7 : vector<32x1xf32> to vector<32x4xf32>
    %20 = arith.mulf %9, %19 : vector<32x4xf32>
    %cst_21 = arith.constant dense<0.000000e+00> : vector<4xf32>
    %21 = vector.multi_reduction <add>, %20, %cst_21 [0] : vector<32x4xf32> to vector<4xf32>
    %22 = vector.shape_cast %21 : vector<4xf32> to vector<1x4xf32>
    %23 = arith.addf %18, %22 : vector<1x4xf32>
    %cst_22 = arith.constant 0.000000e+00 : f32
    %24 = vector.broadcast %cst_22 : f32 to vector<1x4xf32>
    %25 = arith.maximumf %23, %24 : vector<1x4xf32>
    %26 = vector.broadcast %25 : vector<1x4xf32> to vector<4x4xf32>
    %27 = arith.mulf %10, %26 : vector<4x4xf32>
    %cst_23 = arith.constant dense<0.000000e+00> : vector<4xf32>
    %28 = vector.multi_reduction <add>, %27, %cst_23 [1] : vector<4x4xf32> to vector<4xf32>
    %29 = vector.shape_cast %28 : vector<4xf32> to vector<4x1xf32>
    %30 = vector.broadcast %29 : vector<4x1xf32> to vector<4x64xf32>
    %31 = arith.mulf %11, %30 : vector<4x64xf32>
    %cst_24 = arith.constant dense<0.000000e+00> : vector<64xf32>
    %32 = vector.multi_reduction <add>, %31, %cst_24 [0] : vector<4x64xf32> to vector<64xf32>
    %33 = vector.shape_cast %32 : vector<64xf32> to vector<1x64xf32>
    %34 = arith.negf %33 : vector<1x64xf32>
    %35 = math.exp %34 : vector<1x64xf32>
    %cst_25 = arith.constant 1.000000e+00 : f32
    %36 = vector.broadcast %cst_25 : f32 to vector<1x64xf32>
    %37 = arith.addf %36, %35 : vector<1x64xf32>
    %38 = arith.divf %36, %37 : vector<1x64xf32>
    %39 = vector.broadcast %38 : vector<1x64xf32> to vector<32x64xf32>
    %40 = arith.mulf %12, %39 : vector<32x64xf32>
    %cst_26 = arith.constant dense<0.000000e+00> : vector<32xf32>
    %41 = vector.multi_reduction <add>, %40, %cst_26 [1] : vector<32x64xf32> to vector<32xf32>
    %42 = vector.shape_cast %41 : vector<32xf32> to vector<32x1xf32>
    %43 = arith.addf %42, %13 : vector<32x1xf32>
    %cst_27 = arith.constant 0.000000e+00 : f32
    %44 = vector.broadcast %cst_27 : f32 to vector<32x1xf32>
    %45 = arith.cmpf ogt, %43, %44 : vector<32x1xf32>
    %46 = vector.broadcast %14 : vector<1x1xf32> to vector<32x1xf32>
    %47 = arith.mulf %46, %43 : vector<32x1xf32>
    %48 = arith.select %45, %43, %47 : vector<32x1xi1>, vector<32x1xf32>
    %49 = vector.broadcast %48 : vector<32x1xf32> to vector<32x256xf32>
    %50 = arith.mulf %49, %3 : vector<32x256xf32>
    %51 = arith.addf %50, %1 : vector<32x256xf32>
    %cst_28 = arith.constant dense<0xFF800000> : vector<32xf32>
    %52 = vector.multi_reduction <maximumf>, %51, %cst_28 [1] : vector<32x256xf32> to vector<32xf32>
    %53 = vector.shape_cast %52 : vector<32xf32> to vector<32x1xf32>
    %cst_29 = arith.constant dense<0.000000e+00> : vector<32xf32>
    %54 = vector.multi_reduction <add>, %51, %cst_29 [1] : vector<32x256xf32> to vector<32xf32>
    %55 = vector.shape_cast %54 : vector<32xf32> to vector<32x1xf32>
    %cst_30 = arith.constant 3.906250e-03 : f32
    %56 = vector.broadcast %cst_30 : f32 to vector<32x1xf32>
    %57 = arith.mulf %55, %56 : vector<32x1xf32>
    %58 = arith.addf %53, %57 : vector<32x1xf32>
    %cst_31 = arith.constant 2.000000e+00 : f32
    %59 = vector.broadcast %cst_31 : f32 to vector<32x1xf32>
    %60 = arith.addf %58, %59 : vector<32x1xf32>
    %cst_32 = arith.constant 4.000000e+00 : f32
    %61 = vector.broadcast %cst_32 : f32 to vector<32x256xf32>
    %62 = arith.mulf %61, %1 : vector<32x256xf32>
    %63 = vector.broadcast %48 : vector<32x1xf32> to vector<32x256xf32>
    %64 = arith.mulf %63, %3 : vector<32x256xf32>
    %65 = vector.broadcast %60 : vector<32x1xf32> to vector<32x256xf32>
    %66 = arith.mulf %64, %65 : vector<32x256xf32>
    %67 = arith.addf %62, %66 : vector<32x256xf32>
    %c0_33 = arith.constant 0 : index
    %c0_34 = arith.constant 0 : index
    %c0_35 = arith.constant 0 : index
    %68 = vector.load %arg10[%c0_33, %c0_34, %c0_35] : memref<1x32x256xf32, #tpu.memory_space<vmem>>, vector<1x32x256xf32>
    %69 = vector.shape_cast %68 : vector<1x32x256xf32> to vector<32x256xf32>
    %70 = vector.shape_cast %67 : vector<32x256xf32> to vector<1x32x256xf32>
    tpu.vector_store %arg10[%c0_33, %c0_34, %c0_35], %70 {strides = array<i32>} : memref<1x32x256xf32, #tpu.memory_space<vmem>>, vector<1x32x256xf32>,
    return
  }
  func.func @transform_0(%arg0: i32) -> (i32, i32, i32) {
    %c0_i32 = arith.constant 0 : i32
    %c0_i32_0 = arith.constant 0 : i32
    %c0_i32_1 = arith.constant 0 : i32
    return %arg0, %c0_i32, %c0_i32_0 : i32, i32, i32
  }
  func.func @transform_1(%arg0: i32) -> (i32, i32, i32) {
    %c0_i32 = arith.constant 0 : i32
    %c0_i32_0 = arith.constant 0 : i32
    %c0_i32_1 = arith.constant 0 : i32
    return %arg0, %c0_i32, %c0_i32_0 : i32, i32, i32
  }
  func.func @transform_2(%arg0: i32) -> (i32, i32) {
    %c0_i32 = arith.constant 0 : i32
    %c0_i32_0 = arith.constant 0 : i32
    %c0_i32_1 = arith.constant 0 : i32
    return %c0_i32, %c0_i32_0 : i32, i32
  }
  func.func @transform_3(%arg0: i32) -> (i32, i32) {
    %c0_i32 = arith.constant 0 : i32
    %c0_i32_0 = arith.constant 0 : i32
    %c0_i32_1 = arith.constant 0 : i32
    return %c0_i32, %c0_i32_0 : i32, i32
  }
  func.func @transform_4(%arg0: i32) -> (i32, i32) {
    %c0_i32 = arith.constant 0 : i32
    %c0_i32_0 = arith.constant 0 : i32
    %c0_i32_1 = arith.constant 0 : i32
    return %c0_i32, %c0_i32_0 : i32, i32
  }
  func.func @transform_5(%arg0: i32) -> (i32, i32) {
    %c0_i32 = arith.constant 0 : i32
    %c0_i32_0 = arith.constant 0 : i32
    %c0_i32_1 = arith.constant 0 : i32
    return %c0_i32, %c0_i32_0 : i32, i32
  }
  func.func @transform_6(%arg0: i32) -> (i32, i32) {
    %c0_i32 = arith.constant 0 : i32
    %c0_i32_0 = arith.constant 0 : i32
    %c0_i32_1 = arith.constant 0 : i32
    return %c0_i32, %c0_i32_0 : i32, i32
  }
  func.func @transform_7(%arg0: i32) -> (i32, i32) {
    %c0_i32 = arith.constant 0 : i32
    %c0_i32_0 = arith.constant 0 : i32
    %c0_i32_1 = arith.constant 0 : i32
    return %c0_i32, %c0_i32_0 : i32, i32
  }
  func.func @transform_8(%arg0: i32) -> (i32, i32) {
    %c0_i32 = arith.constant 0 : i32
    %c0_i32_0 = arith.constant 0 : i32
    %c0_i32_1 = arith.constant 0 : i32
    return %c0_i32, %c0_i32_0 : i32, i32
  }
  func.func @transform_9(%arg0: i32) -> (i32, i32, i32) {
    %c0_i32 = arith.constant 0 : i32
    %c0_i32_0 = arith.constant 0 : i32
    %c0_i32_1 = arith.constant 0 : i32
    return %arg0, %c0_i32, %c0_i32_0 : i32, i32, i32
  }
}

</mosaic_0001>

<llo_original>
// kernel: tpu_custom_call.1
$region0: #{tpu_custom_call.1}
  #allocation0 [shape = 'u32[]', space=smem, size = 0x4, offset = 0x4, fixed_abs, tag = 'smem constant byte address 0x4 - core index']
  #allocation1 [shape = 'u32[144,128]{1,0:T(1,128)}', space=vmem, size = 0x12000, scoped, tag = 'internal scratch']
  #allocation2 [shape = 'f32[1,1]{1,0:T(1,128)S(1)}', space=vmem, size = 0x200, scoped, tag = 'scoped memory for tpu_custom_call.1']
  %s0 = inlined_call_operand.hbm [shape: f32[2,32,256], index: 0, kind: input, shape index: {}]
  %s1 = inlined_call_operand.hbm [shape: f32[2,32,256], index: 1, kind: input, shape index: {}]
  %s2 = inlined_call_operand.vmem [shape: f32[32,4], index: 2, kind: input, shape index: {}]
  %s3 = inlined_call_operand.vmem [shape: f32[32,4], index: 3, kind: input, shape index: {}]
  %s4 = inlined_call_operand.vmem [shape: f32[4,4], index: 4, kind: input, shape index: {}]
  %s5 = inlined_call_operand.vmem [shape: f32[4,64], index: 5, kind: input, shape index: {}]
  %s6 = inlined_call_operand.vmem [shape: f32[32,64], index: 6, kind: input, shape index: {}]
  %s7 = inlined_call_operand.vmem [shape: f32[32,1], index: 7, kind: input, shape index: {}]
  %s8 = inlined_call_operand.<no memory space> [shape: f32[1,1], index: 8, kind: input, shape index: {}]
  %s9 = inlined_call_operand.hbm [shape: f32[2,32,256], index: 9, kind: output, shape index: {}]
  %s10 = sld [smem:[#allocation0]]
  $region77: #{tpu_custom_call.1} parent=0
    _
  %s12 = ssub.s32 1, %s10
  %s13 = scalar_select 0, %s12, %s10
  %v14 = vstv %s8
  %15 = vst [vmem:[#allocation2] sm:$0x1] %v14
  $region1: #{tpu_custom_call.1} parent=0
    #allocation3 [shape = 'u8[65536]{0}', space=vmem, size = 0x10000, scoped, tag = 'input window, operand 0']
    #allocation4 [shape = 's32[2]{0}', space=sflag, size = 0x8, scoped, tag = 'scoped memory for tpu_custom_call.1']
    #allocation5 [shape = 's32[2]{0}', space=sflag, size = 0x8, scoped, tag = 'scoped memory for tpu_custom_call.1']
    #allocation6 [shape = 'u8[65536]{0}', space=vmem, size = 0x10000, scoped, tag = 'input window, operand 1']
    #allocation7 [shape = 's32[2]{0}', space=sflag, size = 0x8, scoped, tag = 'scoped memory for tpu_custom_call.1']
    #allocation8 [shape = 'u8[65536]{0}', space=vmem, size = 0x10000, scoped, tag = 'output window, operand 0']
    %16 = vsyncpa [#allocation4], 0
    %s17 = scalar_lea.sflag [#allocation4], 1
    %18 = vsyncpa %s17, 0
    %19 = vsyncpa [#allocation7], 0
    %s20 = scalar_lea.sflag [#allocation7], 1
    %21 = vsyncpa %s20, 0
    %22 = vsyncpa [#allocation5], 0
    %s23 = scalar_lea.sflag [#allocation5], 1
    %24 = vsyncpa %s23, 0
    loop: start=0, step=1, limit=4
    $region2: #{tpu_custom_call.1} parent=1 // loop_pre_header
      _
    $region3: #{tpu_custom_call.1} parent=1 // loop_header
      %s26 = sphi 0, %s30
      %p27 = scmp.ge.s32.totalorder %s26, 4
      %s36 = sphi 0, %s38
      %s39 = sphi 0, %s36
      %s40 = sphi 0, %s39
      %s56 = sphi 0, %s40
      %s62 = sphi 0, %s64
      %s65 = sphi 0, %s62
      %s66 = sphi 0, %s65
      %s82 = sphi 0, %s66
      %s86 = sphi 0, %s86
      %s88 = sphi 0, %s86
      %s89 = sphi 0, %s88
      %s103 = sphi 0, %s89
      %s107 = sphi 0, %s107
      %s109 = sphi 0, %s107
      %s110 = sphi 0, %s109
      %s124 = sphi 0, %s110
      %s128 = sphi 0, %s128
      %s130 = sphi 0, %s128
      %s131 = sphi 0, %s130
      %s145 = sphi 0, %s131
      %s149 = sphi 0, %s149
      %s151 = sphi 0, %s149
      %s152 = sphi 0, %s151
      %s166 = sphi 0, %s152
      %s170 = sphi 0, %s170
      %s172 = sphi 0, %s170
      %s173 = sphi 0, %s172
      %s187 = sphi 0, %s173
      %s191 = sphi 0, %s191
      %s193 = sphi 0, %s191
      %s194 = sphi 0, %s193
      %s208 = sphi 0, %s194
      %s212 = sphi 0, %s212
      %s214 = sphi 0, %s212
      %s215 = sphi 0, %s214
      %s229 = sphi 0, %s215
      %s235 = sphi 0, %s237
      %s238 = sphi 0, %s235
      %s239 = sphi 0, %s238
      %s255 = sphi 0, %s239
    $region4: #{tpu_custom_call.1} parent=1 // loop_header_branch
      %29 = sbr.rel (%p27) target = $region8
    $region5: #{tpu_custom_call.1} parent=1 // loop_body
      %s31 = ssub.s32 %s26, 1
      %s32 = ssub.s32 %s26, 2
      %s33 = sadd.s32 %s26, 1
      %s34 = ssub.s32 %s26, %s33
      %p35 = scmp.eq.s32.totalorder %s34, 0
      %s37 = sadd.s32 %s36, 1
      %s38 = scalar_select %p35, %s36, %s37
      %p41 = pneg %p35
      %p42 = scmp.eq.s32.totalorder %s26, 1
      %p43 = por %p41, %p42
      %p44 = scmp.ne.s32.totalorder %s36, %s39
      %p45 = scmp.eq.s32.totalorder %s26, 0
      %p46 = por %p44, %p45
      %p47 = scmp.ne.s32.totalorder %s36, %s39
      %p48 = scmp.eq.s32.totalorder %s31, 1
      %p49 = por %p47, %p48
      %p50 = scmp.ne.s32.totalorder %s39, %s40
      %p51 = scmp.eq.s32.totalorder %s31, 0
      %p52 = por %p50, %p51
      %p53 = scmp.ne.s32.totalorder %s39, %s40
      %p54 = scmp.eq.s32.totalorder %s32, 1
      %p55 = por %p53, %p54
      %p57 = scmp.ne.s32.totalorder %s40, %s56
      %p58 = scmp.eq.s32.totalorder %s32, 0
      %p59 = por %p57, %p58
      %s60 = ssub.s32 %s26, %s33
      %p61 = scmp.eq.s32.totalorder %s60, 0
      %s63 = sadd.s32 %s62, 1
      %s64 = scalar_select %p61, %s62, %s63
      %p67 = pneg %p61
      %p68 = scmp.eq.s32.totalorder %s26, 1
      %p69 = por %p67, %p68
      %p70 = scmp.ne.s32.totalorder %s62, %s65
      %p71 = scmp.eq.s32.totalorder %s26, 0
      %p72 = por %p70, %p71
      %p73 = scmp.ne.s32.totalorder %s62, %s65
      %p74 = scmp.eq.s32.totalorder %s31, 1
      %p75 = por %p73, %p74
      %p76 = scmp.ne.s32.totalorder %s65, %s66
      %p77 = scmp.eq.s32.totalorder %s31, 0
      %p78 = por %p76, %p77
      %p79 = scmp.ne.s32.totalorder %s65, %s66
      %p80 = scmp.eq.s32.totalorder %s32, 1
      %p81 = por %p79, %p80
      %p83 = scmp.ne.s32.totalorder %s66, %s82
      %p84 = scmp.eq.s32.totalorder %s32, 0
      %p85 = por %p83, %p84
      %s87 = sadd.s32 %s86, 1
      %p90 = scmp.eq.s32.totalorder %s26, 1
      %p91 = scmp.ne.s32.totalorder %s86, %s88
      %p92 = scmp.eq.s32.totalorder %s26, 0
      %p93 = por %p91, %p92
      %p94 = scmp.ne.s32.totalorder %s86, %s88
      %p95 = scmp.eq.s32.totalorder %s31, 1
      %p96 = por %p94, %p95
      %p97 = scmp.ne.s32.totalorder %s88, %s89
      %p98 = scmp.eq.s32.totalorder %s31, 0
      %p99 = por %p97, %p98
      %p100 = scmp.ne.s32.totalorder %s88, %s89
      %p101 = scmp.eq.s32.totalorder %s32, 1
      %p102 = por %p100, %p101
      %p104 = scmp.ne.s32.totalorder %s89, %s103
      %p105 = scmp.eq.s32.totalorder %s32, 0
      %p106 = por %p104, %p105
      %s108 = sadd.s32 %s107, 1
      %p111 = scmp.eq.s32.totalorder %s26, 1
      %p112 = scmp.ne.s32.totalorder %s107, %s109
      %p113 = scmp.eq.s32.totalorder %s26, 0
      %p114 = por %p112, %p113
      %p115 = scmp.ne.s32.totalorder %s107, %s109
      %p116 = scmp.eq.s32.totalorder %s31, 1
      %p117 = por %p115, %p116
      %p118 = scmp.ne.s32.totalorder %s109, %s110
      %p119 = scmp.eq.s32.totalorder %s31, 0
      %p120 = por %p118, %p119
      %p121 = scmp.ne.s32.totalorder %s109, %s110
      %p122 = scmp.eq.s32.totalorder %s32, 1
      %p123 = por %p121, %p122
      %p125 = scmp.ne.s32.totalorder %s110, %s124
      %p126 = scmp.eq.s32.totalorder %s32, 0
      %p127 = por %p125, %p126
      %s129 = sadd.s32 %s128, 1
      %p132 = scmp.eq.s32.totalorder %s26, 1
      %p133 = scmp.ne.s32.totalorder %s128, %s130
      %p134 = scmp.eq.s32.totalorder %s26, 0
      %p135 = por %p133, %p134
      %p136 = scmp.ne.s32.totalorder %s128, %s130
      %p137 = scmp.eq.s32.totalorder %s31, 1
      %p138 = por %p136, %p137
      %p139 = scmp.ne.s32.totalorder %s130, %s131
      %p140 = scmp.eq.s32.totalorder %s31, 0
      %p141 = por %p139, %p140
      %p142 = scmp.ne.s32.totalorder %s130, %s131
      %p143 = scmp.eq.s32.totalorder %s32, 1
      %p144 = por %p142, %p143
      %p146 = scmp.ne.s32.totalorder %s131, %s145
      %p147 = scmp.eq.s32.totalorder %s32, 0
      %p148 = por %p146, %p147
      %s150 = sadd.s32 %s149, 1
      %p153 = scmp.eq.s32.totalorder %s26, 1
      %p154 = scmp.ne.s32.totalorder %s149, %s151
      %p155 = scmp.eq.s32.totalorder %s26, 0
      %p156 = por %p154, %p155
      %p157 = scmp.ne.s32.totalorder %s149, %s151
      %p158 = scmp.eq.s32.totalorder %s31, 1
      %p159 = por %p157, %p158
      %p160 = scmp.ne.s32.totalorder %s151, %s152
      %p161 = scmp.eq.s32.totalorder %s31, 0
      %p162 = por %p160, %p161
      %p163 = scmp.ne.s32.totalorder %s151, %s152
      %p164 = scmp.eq.s32.totalorder %s32, 1
      %p165 = por %p163, %p164
      %p167 = scmp.ne.s32.totalorder %s152, %s166
      %p168 = scmp.eq.s32.totalorder %s32, 0
      %p169 = por %p167, %p168
      %s171 = sadd.s32 %s170, 1
      %p174 = scmp.eq.s32.totalorder %s26, 1
      %p175 = scmp.ne.s32.totalorder %s170, %s172
      %p176 = scmp.eq.s32.totalorder %s26, 0
      %p177 = por %p175, %p176
      %p178 = scmp.ne.s32.totalorder %s170, %s172
      %p179 = scmp.eq.s32.totalorder %s31, 1
      %p180 = por %p178, %p179
      %p181 = scmp.ne.s32.totalorder %s172, %s173
      %p182 = scmp.eq.s32.totalorder %s31, 0
      %p183 = por %p181, %p182
      %p184 = scmp.ne.s32.totalorder %s172, %s173
      %p185 = scmp.eq.s32.totalorder %s32, 1
      %p186 = por %p184, %p185
      %p188 = scmp.ne.s32.totalorder %s173, %s187
      %p189 = scmp.eq.s32.totalorder %s32, 0
      %p190 = por %p188, %p189
      %s192 = sadd.s32 %s191, 1
      %p195 = scmp.eq.s32.totalorder %s26, 1
      %p196 = scmp.ne.s32.totalorder %s191, %s193
      %p197 = scmp.eq.s32.totalorder %s26, 0
      %p198 = por %p196, %p197
      %p199 = scmp.ne.s32.totalorder %s191, %s193
      %p200 = scmp.eq.s32.totalorder %s31, 1
      %p201 = por %p199, %p200
      %p202 = scmp.ne.s32.totalorder %s193, %s194
      %p203 = scmp.eq.s32.totalorder %s31, 0
      %p204 = por %p202, %p203
      %p205 = scmp.ne.s32.totalorder %s193, %s194
      %p206 = scmp.eq.s32.totalorder %s32, 1
      %p207 = por %p205, %p206
      %p209 = scmp.ne.s32.totalorder %s194, %s208
      %p210 = scmp.eq.s32.totalorder %s32, 0
      %p211 = por %p209, %p210
      %s213 = sadd.s32 %s212, 1
      %p216 = scmp.eq.s32.totalorder %s26, 1
      %p217 = scmp.ne.s32.totalorder %s212, %s214
      %p218 = scmp.eq.s32.totalorder %s26, 0
      %p219 = por %p217, %p218
      %p220 = scmp.ne.s32.totalorder %s212, %s214
      %p221 = scmp.eq.s32.totalorder %s31, 1
      %p222 = por %p220, %p221
      %p223 = scmp.ne.s32.totalorder %s214, %s215
      %p224 = scmp.eq.s32.totalorder %s31, 0
      %p225 = por %p223, %p224
      %p226 = scmp.ne.s32.totalorder %s214, %s215
      %p227 = scmp.eq.s32.totalorder %s32, 1
      %p228 = por %p226, %p227
      %p230 = scmp.ne.s32.totalorder %s215, %s229
      %p231 = scmp.eq.s32.totalorder %s32, 0
      %p232 = por %p230, %p231
      %s233 = ssub.s32 %s26, %s33
      %p234 = scmp.eq.s32.totalorder %s233, 0
      %s236 = sadd.s32 %s235, 1
      %s237 = scalar_select %p234, %s235, %s236
      %p240 = pneg %p234
      %p241 = scmp.eq.s32.totalorder %s26, 1
      %p242 = por %p240, %p241
      %p243 = scmp.ne.s32.totalorder %s235, %s238
      %p244 = scmp.eq.s32.totalorder %s26, 0
      %p245 = por %p243, %p244
      %p246 = scmp.ne.s32.totalorder %s235, %s238
      %p247 = scmp.eq.s32.totalorder %s31, 1
      %p248 = por %p246, %p247
      %p249 = scmp.ne.s32.totalorder %s238, %s239
      %p250 = scmp.eq.s32.totalorder %s31, 0
      %p251 = por %p249, %p250
      %p252 = scmp.ne.s32.totalorder %s238, %s239
      %p253 = scmp.eq.s32.totalorder %s32, 1
      %p254 = por %p252, %p253
      %p256 = scmp.ne.s32.totalorder %s239, %s255
      %p257 = scmp.eq.s32.totalorder %s32, 0
      %p258 = por %p256, %p257
      %p259 = scmp.le.s32.totalorder 1, %s26
      %p260 = scmp.lt.s32.totalorder %s26, 3
      %p261 = pnand %p259, %p260
      %p262 = pneg %p261
      // Predicated region
      $region9: #{tpu_custom_call.1} parent=5 // pred_check
        _
      $region10: #{tpu_custom_call.1} parent=5 // pred_check_branch
        %264 = sbr.rel (%p261) target = $region12
      $region11: #{tpu_custom_call.1} parent=5 // pred_region
        %s265 = ssub.s32 %s26, 1
        // Predicated region
        $region13: #{tpu_custom_call.1} parent=11 // pred_check
          %p266 = pneg %p99
        $region14: #{tpu_custom_call.1} parent=11 // pred_check_branch
          %268 = sbr.rel (%p266) target = $region16
        $region15: #{tpu_custom_call.1} parent=11 // pred_region
          _
        $region16: #{tpu_custom_call.1} parent=11 // pred_fallthru
          _
        // Predicated region
        $region17: #{tpu_custom_call.1} parent=11 // pred_check
          %p269 = pneg %p120
        $region18: #{tpu_custom_call.1} parent=11 // pred_check_branch
          %271 = sbr.rel (%p269) target = $region20
        $region19: #{tpu_custom_call.1} parent=11 // pred_region
          _
        $region20: #{tpu_custom_call.1} parent=11 // pred_fallthru
          _
        // Predicated region
        $region21: #{tpu_custom_call.1} parent=11 // pred_check
          %p272 = pneg %p141
        $region22: #{tpu_custom_call.1} parent=11 // pred_check_branch
          %274 = sbr.rel (%p272) target = $region24
        $region23: #{tpu_custom_call.1} parent=11 // pred_region
          _
        $region24: #{tpu_custom_call.1} parent=11 // pred_fallthru
          _
        // Predicated region
        $region25: #{tpu_custom_call.1} parent=11 // pred_check
          %p275 = pneg %p162
        $region26: #{tpu_custom_call.1} parent=11 // pred_check_branch
          %277 = sbr.rel (%p275) target = $region28
        $region27: #{tpu_custom_call.1} parent=11 // pred_region
          _
        $region28: #{tpu_custom_call.1} parent=11 // pred_fallthru
          _
        // Predicated region
        $region29: #{tpu_custom_call.1} parent=11 // pred_check
          %p278 = pneg %p183
        $region30: #{tpu_custom_call.1} parent=11 // pred_check_branch
          %280 = sbr.rel (%p278) target = $region32
        $region31: #{tpu_custom_call.1} parent=11 // pred_region
          _
        $region32: #{tpu_custom_call.1} parent=11 // pred_fallthru
          _
        // Predicated region
        $region33: #{tpu_custom_call.1} parent=11 // pred_check
          %p281 = pneg %p204
        $region34: #{tpu_custom_call.1} parent=11 // pred_check_branch
          %283 = sbr.rel (%p281) target = $region36
        $region35: #{tpu_custom_call.1} parent=11 // pred_region
          _
        $region36: #{tpu_custom_call.1} parent=11 // pred_fallthru
          _
        // Predicated region
        $region37: #{tpu_custom_call.1} parent=11 // pred_check
          %p284 = pneg %p225
        $region38: #{tpu_custom_call.1} parent=11 // pred_check_branch
          %286 = sbr.rel (%p284) target = $region40
        $region39: #{tpu_custom_call.1} parent=11 // pred_region
          _
        $region40: #{tpu_custom_call.1} parent=11 // pred_fallthru
          _
      $region12: #{tpu_custom_call.1} parent=5 // pred_fallthru
        _
      %p287 = scmp.lt.s32.totalorder %s26, 2
      // Predicated region
      $region41: #{tpu_custom_call.1} parent=5 // pred_check
        %p288 = pneg %p287
      $region42: #{tpu_custom_call.1} parent=5 // pred_check_branch
        %290 = sbr.rel (%p288) target = $region44
      $region43: #{tpu_custom_call.1} parent=5 // pred_region
        // Predicated region
        $region45: #{tpu_custom_call.1} parent=43 // pred_check
          %p291 = pneg %p46
        $region46: #{tpu_custom_call.1} parent=43 // pred_check_branch
          %293 = sbr.rel (%p291) target = $region48
        $region47: #{tpu_custom_call.1} parent=43 // pred_region
          %s294 = sand.u32 %s36, 1
          %s295 = scalar_lea.sflag [#allocation4], %s294
          %s296 = sand.u32 %s36, 1
          %s297 = smul.addr %s296, 64
          %s298 = scalar_lea.vmem [#allocation3], %s297
          %s300 = ssub.s32 1024, 1024
          %301 = vsyncadd %s295, %s300
          %s302 = smul.addr %s26, 8
          %s303 = smul.addr %s302, 128
          %s304 = scalar_lea.hbm %s0, %s303
          %s305 = sshll.u32 %s298, 4
          %s306 = int_to_ptr.vmem [resolvable:$true] %s305
          %311 = dma.hbm_to_vmem [thread:$0]  %s304, 1024, %s306, %s295, 256, 256, 16
        $region48: #{tpu_custom_call.1} parent=43 // pred_fallthru
          _
        // Predicated region
        $region49: #{tpu_custom_call.1} parent=43 // pred_check
          %p312 = pneg %p72
        $region50: #{tpu_custom_call.1} parent=43 // pred_check_branch
          %314 = sbr.rel (%p312) target = $region52
        $region51: #{tpu_custom_call.1} parent=43 // pred_region
          %s315 = sand.u32 %s62, 1
          %s316 = scalar_lea.sflag [#allocation7], %s315
          %s317 = sand.u32 %s62, 1
          %s318 = smul.addr %s317, 64
          %s319 = scalar_lea.vmem [#allocation6], %s318
          %s321 = ssub.s32 1024, 1024
          %322 = vsyncadd %s316, %s321
          %s323 = smul.addr %s26, 8
          %s324 = smul.addr %s323, 128
          %s325 = scalar_lea.hbm %s1, %s324
          %s326 = sshll.u32 %s319, 4
          %s327 = int_to_ptr.vmem [resolvable:$true] %s326
          %332 = dma.hbm_to_vmem [thread:$0]  %s325, 1024, %s327, %s316, 256, 256, 16
        $region52: #{tpu_custom_call.1} parent=43 // pred_fallthru
          _
      $region44: #{tpu_custom_call.1} parent=5 // pred_fallthru
        _
      %p333 = scmp.le.s32.totalorder 1, %s26
      %p334 = scmp.lt.s32.totalorder %s26, 3
      %p335 = pnand %p333, %p334
      %p336 = pneg %p335
      // Predicated region
      $region53: #{tpu_custom_call.1} parent=5 // pred_check
        _
      $region54: #{tpu_custom_call.1} parent=5 // pred_check_branch
        %338 = sbr.rel (%p335) target = $region56
      $region55: #{tpu_custom_call.1} parent=5 // pred_region
        %s339 = ssub.s32 %s26, 1
        %s340 = sand.u32 %s39, 1
        %s341 = scalar_lea.sflag [#allocation4], %s340
        %s342 = sand.u32 %s39, 1
        %s343 = smul.addr %s342, 64
        %s344 = scalar_lea.vmem [#allocation3], %s343
        // Predicated region
        $region57: #{tpu_custom_call.1} parent=55 // pred_check
          %p345 = pneg %p52
        $region58: #{tpu_custom_call.1} parent=55 // pred_check_branch
          %347 = sbr.rel (%p345) target = $region60
        $region59: #{tpu_custom_call.1} parent=55 // pred_region
          %348 = dma.done %s341, 1024
        $region60: #{tpu_custom_call.1} parent=55 // pred_fallthru
          _
        %s349 = sand.u32 %s65, 1
        %s350 = scalar_lea.sflag [#allocation7], %s349
        %s351 = sand.u32 %s65, 1
        %s352 = smul.addr %s351, 64
        %s353 = scalar_lea.vmem [#allocation6], %s352
        // Predicated region
        $region61: #{tpu_custom_call.1} parent=55 // pred_check
          %p354 = pneg %p78
        $region62: #{tpu_custom_call.1} parent=55 // pred_check_branch
          %356 = sbr.rel (%p354) target = $region64
        $region63: #{tpu_custom_call.1} parent=55 // pred_region
          %357 = dma.done %s350, 1024
        $region64: #{tpu_custom_call.1} parent=55 // pred_fallthru
          _
        %s358 = sand.u32 %s39, 1
        %s359 = scalar_lea.sflag [#allocation4], %s358
        %s360 = sand.u32 %s39, 1
        %s361 = smul.addr %s360, 64
        %s362 = scalar_lea.vmem [#allocation3], %s361
        %p363 = pneg %p52
        %p364 = pneg %p49
        %s365 = sand.u32 %s65, 1
        %s366 = scalar_lea.sflag [#allocation7], %s365
        %s367 = sand.u32 %s65, 1
        %s368 = smul.addr %s367, 64
        %s369 = scalar_lea.vmem [#allocation6], %s368
        %p370 = pneg %p78
        %p371 = pneg %p75
        %p372 = pneg %p99
        %p373 = pneg %p96
        %p374 = pneg %p120
        %p375 = pneg %p117
        %p376 = pneg %p141
        %p377 = pneg %p138
        %p378 = pneg %p162
        %p379 = pneg %p159
        %p380 = pneg %p183
        %p381 = pneg %p180
        %p382 = pneg %p204
        %p383 = pneg %p201
        %p384 = pneg %p225
        %p385 = pneg %p222
        %p386 = pneg %p251
        %p387 = pneg %p248
        %s388 = sand.u32 %s238, 1
        %s389 = scalar_lea.sflag [#allocation5], %s388
        %s390 = sand.u32 %s238, 1
        %s391 = smul.addr %s390, 64
        %s392 = scalar_lea.vmem [#allocation8], %s391
        %v393 = vld [vmem:[%s344] sm:$0xff]
        %v394 = vld [vmem:[%s344 + $0x8] sm:$0xff]
        %v395 = vld [vmem:[%s344 + $0x10] sm:$0xff]
        %v396 = vld [vmem:[%s344 + $0x18] sm:$0xff]
        %v397 = vld [vmem:[%s344 + $0x20] sm:$0xff]
        %v398 = vld [vmem:[%s344 + $0x28] sm:$0xff]
        %v399 = vld [vmem:[%s344 + $0x30] sm:$0xff]
        %v400 = vld [vmem:[%s344 + $0x38] sm:$0xff]
        %v401 = vld [vmem:[%s353] sm:$0xff]
        %v402 = vld [vmem:[%s353 + $0x8] sm:$0xff]
        %v403 = vld [vmem:[%s353 + $0x10] sm:$0xff]
        %v404 = vld [vmem:[%s353 + $0x18] sm:$0xff]
        %v405 = vld [vmem:[%s353 + $0x20] sm:$0xff]
        %v406 = vld [vmem:[%s353 + $0x28] sm:$0xff]
        %v407 = vld [vmem:[%s353 + $0x30] sm:$0xff]
        %v408 = vld [vmem:[%s353 + $0x38] sm:$0xff]
        %v409 = vmax.f32 %v401, %v402
        %410 = vmax.xlane.f32.xlu0 %v409
        %v411 = vpop.xlane.xlu0 %410
        %v412 = vmax.f32 %v403, %v404
        %413 = vmax.xlane.f32.xlu0 %v412
        %v414 = vpop.xlane.xlu0 %413
        %v415 = vmax.f32 %v405, %v406
        %416 = vmax.xlane.f32.xlu0 %v415
        %v417 = vpop.xlane.xlu0 %416
        %v418 = vmax.f32 %v407, %v408
        %419 = vmax.xlane.f32.xlu0 %v418
        %v420 = vpop.xlane.xlu0 %419
        %v421 = vmax.f32 %v393, %v394
        %422 = vmax.xlane.f32.xlu0 %v421
        %v423 = vpop.xlane.xlu0 %422
        %v424 = vmax.f32 %v395, %v396
        %425 = vmax.xlane.f32.xlu0 %v424
        %v426 = vpop.xlane.xlu0 %425
        %v427 = vmax.f32 %v397, %v398
        %428 = vmax.xlane.f32.xlu0 %v427
        %v429 = vpop.xlane.xlu0 %428
        %v430 = vmax.f32 %v399, %v400
        %431 = vmax.xlane.f32.xlu0 %v430
        %v432 = vpop.xlane.xlu0 %431
        %v433 = vld [vmem:[%s2] sm:$0xff]
        %v434 = vld [vmem:[%s2 + $0x8] sm:$0xff]
        %v435 = vld [vmem:[%s2 + $0x10] sm:$0xff]
        %v436 = vld [vmem:[%s2 + $0x18] sm:$0xff]
        %v437 = vld [vmem:[%s3] sm:$0xff]
        %v438 = vld [vmem:[%s3 + $0x8] sm:$0xff]
        %v439 = vld [vmem:[%s3 + $0x10] sm:$0xff]
        %v440 = vld [vmem:[%s3 + $0x18] sm:$0xff]
        %v441 = vld [vmem:[%s4] sm:$0xf]
        %v442 = vld [vmem:[%s5] sm:$0xf]
        %v443 = vld [vmem:[%s6] sm:$0xff]
        %v444 = vld [vmem:[%s6 + $0x8] sm:$0xff]
        %v445 = vld [vmem:[%s6 + $0x10] sm:$0xff]
        %v446 = vld [vmem:[%s6 + $0x18] sm:$0xff]
        %v447 = vld [vmem:[%s7] sm:$0xff]
        %v448 = vld [vmem:[%s7 + $0x8] sm:$0xff]
        %v449 = vld [vmem:[%s7 + $0x10] sm:$0xff]
        %v450 = vld [vmem:[%s7 + $0x18] sm:$0xff]
        %v451 = vld [vmem:[#allocation2] sm:$0x1]
        %v452 = vmul.f32 %v433, %v411
        %v453 = vmul.f32 %v434, %v414
        %v454 = vmul.f32 %v435, %v417
        %v455 = vmul.f32 %v436, %v420
        %vm456 = vcmask 31744
        %v457 = vsel %vm456, %v452, 0.0
        %v458 = vsel %vm456, %v453, 0.0
        %v459 = vadd.f32 %v457, %v458
        %v460 = vsel %vm456, %v454, 0.0
        %v461 = vadd.f32 %v459, %v460
        %v462 = vsel %vm456, %v455, 0.0
        %v463 = vadd.f32 %v461, %v462
        %v464 = vrot.slane %v463, 4
        %v465 = vadd.f32 %v463, %v464
        %v466 = vrot.slane %v465, 2
        %v467 = vadd.f32 %v465, %v466
        %v468 = vrot.slane %v467, 1
        %v469 = vadd.f32 %v467, %v468
        %v470 = vmul.f32 %v437, %v423
        %v471 = vmul.f32 %v438, %v426
        %v472 = vmul.f32 %v439, %v429
        %v473 = vmul.f32 %v440, %v432
        %v474 = vsel %vm456, %v470, 0.0
        %v475 = vsel %vm456, %v471, 0.0
        %v476 = vadd.f32 %v474, %v475
        %v477 = vsel %vm456, %v472, 0.0
        %v478 = vadd.f32 %v476, %v477
        %v479 = vsel %vm456, %v473, 0.0
        %v480 = vadd.f32 %v478, %v479
        %v481 = vrot.slane %v480, 4
        %v482 = vadd.f32 %v480, %v481
        %v483 = vrot.slane %v482, 2
        %v484 = vadd.f32 %v482, %v483
        %v485 = vrot.slane %v484, 1
        %v486 = vadd.f32 %v484, %v485
        %v487 = vadd.f32 %v469, %v486
        %v488 = vmax.f32 %v487, 0.0
        %v489 = vmul.f32 %v441, %v488
        %vm490 = vcmask 27648
        %v491 = vsel %vm490, %v489, 0.0
        %492 = vadd.xlane.f32.xlu0 %v491
        %v493 = vpop.xlane.xlu0 %492
        %v494 = vmul.f32 %v442, %v493
        %vm495 = vcmask 519168
        %v496 = vsel %vm495, %v494, 0.0
        %v497 = vrot.slane %v496, 4
        %v498 = vadd.f32 %v496, %v497
        %v499 = vrot.slane %v498, 2
        %v500 = vadd.f32 %v498, %v499
        %v501 = vrot.slane %v500, 1
        %v502 = vadd.f32 %v500, %v501
        %v503 = vxor.u32 %v502, 2147483648
        %v504 = vmul.f32 %v503, 1.442695
        %v505 = vpow.pop %v504
        %v506 = vadd.f32 %v505, 1.0
        %v507 = vrcp.pop %v506
        %v508 = vmul.f32 1.0, %v507
        %v509 = vmul.f32 %v443, %v508
        %v510 = vmul.f32 %v444, %v508
        %v511 = vmul.f32 %v445, %v508
        %v512 = vmul.f32 %v446, %v508
        %vm513 = vcmask 523264
        %v514 = vsel %vm513, %v509, 0.0
        %515 = vadd.xlane.f32.xlu0 %v514
        %v516 = vpop.xlane.xlu0 %515
        %v517 = vsel %vm513, %v510, 0.0
        %518 = vadd.xlane.f32.xlu0 %v517
        %v519 = vpop.xlane.xlu0 %518
        %v520 = vsel %vm513, %v511, 0.0
        %521 = vadd.xlane.f32.xlu0 %v520
        %v522 = vpop.xlane.xlu0 %521
        %v523 = vsel %vm513, %v512, 0.0
        %524 = vadd.xlane.f32.xlu0 %v523
        %v525 = vpop.xlane.xlu0 %524
        %v526 = vadd.f32 %v516, %v447
        %v527 = vadd.f32 %v519, %v448
        %v528 = vadd.f32 %v522, %v449
        %v529 = vadd.f32 %v525, %v450
        %vm530 = vcmp.gt.f32.partialorder %v526, 0.0
        %vm531 = vcmp.gt.f32.partialorder %v527, 0.0
        %vm532 = vcmp.gt.f32.partialorder %v528, 0.0
        %vm533 = vcmp.gt.f32.partialorder %v529, 0.0
        %v535 = vlaneseq
        %v536 = vshrl.u32 %v535, 7
        %v537 = vsub.s32 0, %v536
        %v538 = vrot.slane %v451, %v537
        %v540 = vmul.f32 %v538, %v526
        %v541 = vmul.f32 %v538, %v527
        %v542 = vmul.f32 %v538, %v528
        %v543 = vmul.f32 %v538, %v529
        %v544 = vsel %vm530, %v526, %v540
        %v545 = vsel %vm531, %v527, %v541
        %v546 = vsel %vm532, %v528, %v542
        %v547 = vsel %vm533, %v529, %v543
        %549 = vset.pattern.permute.xlu0 0
        %550 = vperm.xlu0 %549, %v544
        %v551 = vpop.permute.xlu0 %550
        %554 = vset.pattern.permute.xlu0 0
        %555 = vperm.xlu0 %554, %v545
        %v556 = vpop.permute.xlu0 %555
        %559 = vset.pattern.permute.xlu0 0
        %560 = vperm.xlu0 %559, %v546
        %v561 = vpop.permute.xlu0 %560
        %564 = vset.pattern.permute.xlu0 0
        %565 = vperm.xlu0 %564, %v547
        %v566 = vpop.permute.xlu0 %565
        %v568 = vmul.f32 %v551, %v401
        %v569 = vmul.f32 %v551, %v402
        %v570 = vmul.f32 %v556, %v403
        %v571 = vmul.f32 %v556, %v404
        %v572 = vmul.f32 %v561, %v405
        %v573 = vmul.f32 %v561, %v406
        %v574 = vmul.f32 %v566, %v407
        %v575 = vmul.f32 %v566, %v408
        %v576 = vadd.f32 %v568, %v393
        %v577 = vadd.f32 %v569, %v394
        %v578 = vadd.f32 %v570, %v395
        %v579 = vadd.f32 %v571, %v396
        %v580 = vadd.f32 %v572, %v397
        %v581 = vadd.f32 %v573, %v398
        %v582 = vadd.f32 %v574, %v399
        %v583 = vadd.f32 %v575, %v400
        %v584 = vmax.f32 %v576, %v577
        %585 = vmax.xlane.f32.xlu0 %v584
        %v586 = vpop.xlane.xlu0 %585
        %v587 = vmax.f32 %v578, %v579
        %588 = vmax.xlane.f32.xlu0 %v587
        %v589 = vpop.xlane.xlu0 %588
        %v590 = vmax.f32 %v580, %v581
        %591 = vmax.xlane.f32.xlu0 %v590
        %v592 = vpop.xlane.xlu0 %591
        %v593 = vmax.f32 %v582, %v583
        %594 = vmax.xlane.f32.xlu0 %v593
        %v595 = vpop.xlane.xlu0 %594
        %v596 = vadd.f32 %v576, %v577
        %597 = vadd.xlane.f32.xlu0 %v596
        %v598 = vpop.xlane.xlu0 %597
        %v599 = vadd.f32 %v578, %v579
        %600 = vadd.xlane.f32.xlu0 %v599
        %v601 = vpop.xlane.xlu0 %600
        %v602 = vadd.f32 %v580, %v581
        %603 = vadd.xlane.f32.xlu0 %v602
        %v604 = vpop.xlane.xlu0 %603
        %v605 = vadd.f32 %v582, %v583
        %606 = vadd.xlane.f32.xlu0 %v605
        %v607 = vpop.xlane.xlu0 %606
        %v608 = vmul.f32 %v598, 0.00390625
        %v609 = vmul.f32 %v601, 0.00390625
        %v610 = vmul.f32 %v604, 0.00390625
        %v611 = vmul.f32 %v607, 0.00390625
        %v612 = vadd.f32 %v586, %v608
        %v613 = vadd.f32 %v589, %v609
        %v614 = vadd.f32 %v592, %v610
        %v615 = vadd.f32 %v595, %v611
        %v616 = vadd.f32 %v612, 2.0
        %v617 = vadd.f32 %v613, 2.0
        %v618 = vadd.f32 %v614, 2.0
        %v619 = vadd.f32 %v615, 2.0
        %v620 = vmul.f32 %v393, 4.0
        %v621 = vmul.f32 %v394, 4.0
        %v622 = vmul.f32 %v395, 4.0
        %v623 = vmul.f32 %v396, 4.0
        %v624 = vmul.f32 %v397, 4.0
        %v625 = vmul.f32 %v398, 4.0
        %v626 = vmul.f32 %v399, 4.0
        %v627 = vmul.f32 %v400, 4.0
        %v628 = vmul.f32 %v568, %v616
        %v629 = vmul.f32 %v569, %v616
        %v630 = vmul.f32 %v570, %v617
        %v631 = vmul.f32 %v571, %v617
        %v632 = vmul.f32 %v572, %v618
        %v633 = vmul.f32 %v573, %v618
        %v634 = vmul.f32 %v574, %v619
        %v635 = vmul.f32 %v575, %v619
        %v636 = vadd.f32 %v620, %v628
        %v637 = vadd.f32 %v621, %v629
        %v638 = vadd.f32 %v622, %v630
        %v639 = vadd.f32 %v623, %v631
        %v640 = vadd.f32 %v624, %v632
        %v641 = vadd.f32 %v625, %v633
        %v642 = vadd.f32 %v626, %v634
        %v643 = vadd.f32 %v627, %v635
        %644 = vst [vmem:[%s392] sm:$0xff] %v636
        %645 = vst [vmem:[%s392 + $0x8] sm:$0xff] %v637
        %646 = vst [vmem:[%s392 + $0x10] sm:$0xff] %v638
        %647 = vst [vmem:[%s392 + $0x18] sm:$0xff] %v639
        %648 = vst [vmem:[%s392 + $0x20] sm:$0xff] %v640
        %649 = vst [vmem:[%s392 + $0x28] sm:$0xff] %v641
        %650 = vst [vmem:[%s392 + $0x30] sm:$0xff] %v642
        %651 = vst [vmem:[%s392 + $0x38] sm:$0xff] %v643
        %s652 = sand.u32 %s238, 1
        %s653 = scalar_lea.sflag [#allocation5], %s652
        %s654 = sand.u32 %s238, 1
        %s655 = smul.addr %s654, 64
        %s656 = scalar_lea.vmem [#allocation8], %s655
        // Predicated region
        $region65: #{tpu_custom_call.1} parent=55 // pred_check
          %p657 = pneg %p248
        $region66: #{tpu_custom_call.1} parent=55 // pred_check_branch
          %659 = sbr.rel (%p657) target = $region68
        $region67: #{tpu_custom_call.1} parent=55 // pred_region
          %s661 = ssub.s32 1024, 1024
          %662 = vsyncadd %s653, %s661
          %s663 = smul.addr %s31, 8
          %s664 = smul.addr %s663, 128
          %s665 = scalar_lea.hbm %s9, %s664
          %s666 = sshll.u32 %s656, 4
          %s667 = int_to_ptr.vmem [resolvable:$true] %s666
          %672 = dma.vmem_to_hbm [thread:$0]  %s667, 1024, %s665, %s653, 256, 256, 16
        $region68: #{tpu_custom_call.1} parent=55 // pred_fallthru
          _
      $region56: #{tpu_custom_call.1} parent=5 // pred_fallthru
        _
      %p673 = scmp.le.s32.totalorder 2, %s26
      // Predicated region
      $region69: #{tpu_custom_call.1} parent=5 // pred_check
        %p674 = pneg %p673
      $region70: #{tpu_custom_call.1} parent=5 // pred_check_branch
        %676 = sbr.rel (%p674) target = $region72
      $region71: #{tpu_custom_call.1} parent=5 // pred_region
        %s677 = ssub.s32 %s26, 2
        // Predicated region
        $region73: #{tpu_custom_call.1} parent=71 // pred_check
          %p678 = pneg %p254
        $region74: #{tpu_custom_call.1} parent=71 // pred_check_branch
          %680 = sbr.rel (%p678) target = $region76
        $region75: #{tpu_custom_call.1} parent=71 // pred_region
          %s681 = sand.u32 %s239, 1
          %s682 = scalar_lea.sflag [#allocation5], %s681
          %s683 = sand.u32 %s239, 1
          %s684 = smul.addr %s683, 64
          %s685 = scalar_lea.vmem [#allocation8], %s684
          %686 = dma.done %s682, 1024
        $region76: #{tpu_custom_call.1} parent=71 // pred_fallthru
          _
      $region72: #{tpu_custom_call.1} parent=5 // pred_fallthru
        _
    $region6: #{tpu_custom_call.1} parent=1 // loop_footer
      %s30 = sadd.s32 1, %s26
    $region7: #{tpu_custom_call.1} parent=1 // loop_footer_branch
      %25 = sbr.rel target = $region3
    $region8: #{tpu_custom_call.1} parent=1 // loop_exit
      _
    %687 = vsyncpa [#allocation4], 1
    %s688 = scalar_lea.sflag [#allocation4], 1
    %689 = vsyncpa %s688, 1
    %690 = vsyncpa [#allocation7], 1
    %s691 = scalar_lea.sflag [#allocation7], 1
    %692 = vsyncpa %s691, 1
    %693 = vsyncpa [#allocation5], 1
    %s694 = scalar_lea.sflag [#allocation5], 1
    %695 = vsyncpa %s694, 1

</llo_original>
